<compile_context>
chip_gen: v6e
topology: v6e:2x2x1
jax: 0.10.0
libtpu: 0.0.40
codegen_flags: <defaults>
</compile_context>

<pallas_src>
from math import gcd

import jax
import jax.numpy as jnp
from jax.experimental import pallas as pl
from jax.experimental.pallas import tpu as pltpu


def _dropblock_kernel(scale_ref, x_ref, cov_ref, o_ref):
    """One lane-dense tile: out = where(cov, 0, x * scale).

    scale_ref : SMEM f32[1]   -- precomputed countM / count_ones
    x_ref     : VMEM (r, c)   x.dtype
    cov_ref   : VMEM (r, c)   int8 coverage mask (1 = dropped, 0 = keep)
    o_ref     : VMEM (r, c)   x.dtype
    """
    scale = scale_ref[0]
    # Compute in f32; single cast at the store (exact for f32 x, accurate for bf16,
    # and avoids bf16 VALU ops on v5e).
    xs = x_ref[...].astype(jnp.float32) * scale
    dropped = cov_ref[...] != 0
    o_ref[...] = jnp.where(dropped, jnp.float32(0.0), xs).astype(o_ref.dtype)


def _pack_factor(bc, hw):
    """Smallest g with bc % g == 0 and (g*hw) % 128 == 0 (lane-dense packing)."""
    g0 = 128 // gcd(hw, 128)
    if g0 == 1:
        return 1
    g = g0
    while g <= bc:
        if bc % g == 0:
            return g
        g += g0
    # TODO(synk): no exact packing exists (e.g. HW=49 with B*C not a multiple of
    # 128); fall back to the un-packed layout (masked partial stores, still correct).
    return 1


def _choose_tiles(rows, width, x_bytes, target_bytes=4 * 1024 * 1024):
    """Pick a legal (row_tile, col_tile) under the (8,128) rule.

    Preference order: fits the per-tile byte budget; grid has >= 2 steps (use
    both v7x TensorCores); grid is even (balanced across the 2 TCs); row tile
    32-aligned (native int8/bf16/f32 sublane tiling); then biggest tile that
    fits (smallest tile if nothing fits the budget).
    """
    row_opts = sorted({d for d in range(8, rows + 1, 8) if rows % d == 0} | {rows})
    col_opts = sorted({d for d in range(128, width + 1, 128) if width % d == 0} | {width})
    best_key, best = None, None
    for r in row_opts:
        for c in col_opts:
            fits = r * c * x_bytes <= target_bytes
            steps = (rows // r) * (width // c)
            key = (
                fits,
                steps >= 2,
                steps % 2 == 0,
                (r % 32 == 0) or r == rows,
                r * c if fits else -(r * c),
            )
            if best_key is None or key > best_key:
                best_key, best = key, (r, c)
    return best


def dropblock(x, gamma, block_size, key, training=True):
    """JAX/Pallas equivalent of DropBlock.forward(x, gamma)."""
    if not training:
        return x

    B, C, H, W = x.shape
    bs = block_size
    Hm, Wm = H - (bs - 1), W - (bs - 1)
    BC, HW = B * C, H * W
    pad = bs - 1

    # 1) Bernoulli seed mask (plain-JAX RNG; deterministic & testable).
    # TODO(synk): RNG could move in-kernel via pltpu.prng_random_bits, but that
    # couples tiles through the global sum and loses bit-exact testability.
    seeds = jax.random.bernoulli(key, gamma, (B, C, Hm, Wm))

    # 2) Coverage mask (bs x bs dilation of the seeds) + global scale, computed
    #    once in XLA on the tiny seed mask.  This is what the kernel consumes.
    pm = jnp.pad(seeds.astype(jnp.float32), ((0, 0), (0, 0), (pad, pad), (pad, pad)))
    cov = jax.lax.reduce_window(pm, 0.0, jax.lax.max,
                                (1, 1, bs, bs), (1, 1, 1, 1), "VALID")  # (B,C,H,W)
    count_m = float(BC * HW)
    count_ones = count_m - jnp.sum(cov)
    # Guard the all-dropped degenerate case (PyTorch original would inf/NaN here).
    scale = (count_m / jnp.maximum(count_ones, 1.0)).astype(jnp.float32).reshape(1)

    # 3) Lane-dense layout: flatten to (BC, HW), then pack g images per lane-row
    #    so the lane axis is a multiple of 128 (free contiguous reshape).
    cov_i8 = cov.astype(jnp.int8).reshape(BC, HW)
    x2 = x.reshape(BC, HW)
    g = _pack_factor(BC, HW)
    rows, width = BC // g, g * HW
    x2 = x2.reshape(rows, width)
    cov_i8 = cov_i8.reshape(rows, width)

    # 4) Tiling + VMEM budget from the real per-step footprint.
    x_bytes = x.dtype.itemsize
    bc_tile, w_tile = _choose_tiles(rows, width, x_bytes)
    grid = (rows // bc_tile, width // w_tile)
    per_buf = bc_tile * w_tile * (2 * x_bytes + 1)           # x + out + int8 mask
    vmem_limit = int(min(max(4 * per_buf + (8 << 20), 32 << 20), 56 << 20))

    n_elems = rows * width
    bytes_accessed = n_elems * (2 * x_bytes + 1) + 4
    flops = 2 * n_elems                                       # mul + select

    out2 = pl.pallas_call(
        _dropblock_kernel,
        out_shape=jax.ShapeDtypeStruct((rows, width), x.dtype),
        grid=grid,
        in_specs=[
            pl.BlockSpec(memory_space=pltpu.MemorySpace.SMEM),        # scale scalar
            pl.BlockSpec((bc_tile, w_tile), lambda i, j: (i, j)),     # x (lane-dense)
            pl.BlockSpec((bc_tile, w_tile), lambda i, j: (i, j)),     # int8 coverage
        ],
        out_specs=pl.BlockSpec((bc_tile, w_tile), lambda i, j: (i, j)),
        compiler_params=pltpu.CompilerParams(
            dimension_semantics=("parallel", "parallel"),   # shard over 2 TCs on v7x
            vmem_limit_bytes=vmem_limit,
        ),
        cost_estimate=pl.CostEstimate(
            flops=flops, transcendentals=0, bytes_accessed=bytes_accessed),
    )(scale, x2, cov_i8)

    return out2.reshape(B, C, H, W)


if __name__ == "__main__":
    key = jax.random.PRNGKey(0)
    kx, km = jax.random.split(key)

    B, C, H, W = 2, 4, 16, 16
    block_size = 3
    gamma = 0.1

    x = jax.random.normal(kx, (B, C, H, W), dtype=jnp.float32)

    out = jax.block_until_ready(dropblock(x, gamma, block_size, km, training=True))

    # Independent pure-JAX reference (same RNG key -> identical seed mask).
    Hm, Wm = H - (block_size - 1), W - (block_size - 1)
    seeds = jax.random.bernoulli(km, gamma, (B, C, Hm, Wm)).astype(jnp.float32)
    pad = block_size - 1
    pm = jnp.pad(seeds, ((0, 0), (0, 0), (pad, pad), (pad, pad)))
    cov = jax.lax.reduce_window(pm, 0.0, jax.lax.max,
                                (1, 1, block_size, block_size), (1, 1, 1, 1), "VALID")
    block_mask = 1.0 - cov
    count_m = float(B * C * H * W)
    ref = block_mask * x * (count_m / jnp.maximum(block_mask.sum(), 1.0))

    assert out.shape == x.shape and out.dtype == x.dtype
    assert jnp.allclose(out, ref, atol=1e-4, rtol=1e-4), "mismatch vs reference"

    # Eval path is identity.
    assert jnp.array_equal(dropblock(x, gamma, block_size, km, training=False), x)
    print("KERNEL_OK")
</pallas_src>

<mosaic_0001>
module attributes {stable_mosaic.version = 11 : i64} {
  func.func @_dropblock_kernel(%arg0: i32, %arg1: i32, %arg2: memref<1xf32, #tpu.memory_space<smem>>, %arg3: memref<8x128xf32, #tpu.memory_space<vmem>>, %arg4: memref<8x128xi8, #tpu.memory_space<vmem>>, %arg5: memref<8x128xf32, #tpu.memory_space<vmem>>) attributes {dimension_semantics = [#tpu.dimension_semantics<parallel>, #tpu.dimension_semantics<parallel>], iteration_bounds = array<i64: 1, 2>, scalar_prefetch = 0 : i64, scratch_operands = 0 : i64, tpu.core_type = #tpu.core_type<tc>, window_params = [{transform_indices = @transform_0, window_bounds = array<i64: 1>}, {transform_indices = @transform_1, window_bounds = array<i64: 8, 128>}, {transform_indices = @transform_2, window_bounds = array<i64: 8, 128>}, {transform_indices = @transform_3, window_bounds = array<i64: 8, 128>}]} {
    %c0 = arith.constant 0 : index
    %0 = memref.load %arg2[%c0] : memref<1xf32, #tpu.memory_space<smem>>
    %c0_0 = arith.constant 0 : index
    %c0_1 = arith.constant 0 : index
    %1 = vector.load %arg3[%c0_0, %c0_1] : memref<8x128xf32, #tpu.memory_space<vmem>>, vector<8x128xf32>
    %2 = vector.broadcast %0 : f32 to vector<8x128xf32>
    %3 = arith.mulf %1, %2 : vector<8x128xf32>
    %c0_2 = arith.constant 0 : index
    %c0_3 = arith.constant 0 : index
    %4 = vector.load %arg4[%c0_2, %c0_3] : memref<8x128xi8, #tpu.memory_space<vmem>>, vector<8x128xi8>
    %c0_i8 = arith.constant 0 : i8
    %5 = vector.broadcast %c0_i8 : i8 to vector<8x128xi8>
    %6 = arith.cmpi ne, %4, %5 : vector<8x128xi8>
    %cst = arith.constant 0.000000e+00 : f32
    %7 = vector.broadcast %cst : f32 to vector<8x128xf32>
    %8 = arith.select %6, %7, %3 : vector<8x128xi1>, vector<8x128xf32>
    %c0_4 = arith.constant 0 : index
    %c0_5 = arith.constant 0 : index
    %9 = vector.load %arg5[%c0_4, %c0_5] : memref<8x128xf32, #tpu.memory_space<vmem>>, vector<8x128xf32>
    tpu.vector_store %arg5[%c0_4, %c0_5], %8 {strides = array<i32>} : memref<8x128xf32, #tpu.memory_space<vmem>>, vector<8x128xf32>,
    return
  }
  func.func @transform_0(%arg0: i32, %arg1: i32) -> i32 {
    %c0_i32 = arith.constant 0 : i32
    %c0_i32_0 = arith.constant 0 : i32
    return %c0_i32 : i32
  }
  func.func @transform_1(%arg0: i32, %arg1: i32) -> (i32, i32) {
    %c0_i32 = arith.constant 0 : i32
    return %arg0, %arg1 : i32, i32
  }
  func.func @transform_2(%arg0: i32, %arg1: i32) -> (i32, i32) {
    %c0_i32 = arith.constant 0 : i32
    return %arg0, %arg1 : i32, i32
  }
  func.func @transform_3(%arg0: i32, %arg1: i32) -> (i32, i32) {
    %c0_i32 = arith.constant 0 : i32
    return %arg0, %arg1 : i32, i32
  }
}

</mosaic_0001>

<llo_original>
// kernel: tpu_custom_call.1
$region0: #{tpu_custom_call.1}
  #allocation0 [shape = 'u32[]', space=smem, size = 0x4, offset = 0x4, fixed_abs, tag = 'smem constant byte address 0x4 - core index']
  #allocation1 [shape = 'u32[144,128]{1,0:T(1,128)}', space=vmem, size = 0x12000, scoped, tag = 'internal scratch']
  #allocation2 [shape = 'f32[1]{0:T(128)S(6)}', space=smem, size = 0x200, scoped, tag = 'scoped memory for tpu_custom_call.1']
  %s0 = inlined_call_operand.<no memory space> [shape: f32[1], index: 0, kind: input, shape index: {}]
  %s1 = inlined_call_operand.hbm [shape: f32[8,256], index: 1, kind: input, shape index: {}]
  %s2 = inlined_call_operand.hbm [shape: s8[8,256], index: 2, kind: input, shape index: {}]
  %s3 = inlined_call_operand.hbm [shape: f32[8,256], index: 3, kind: output, shape index: {}]
  %s4 = sld [smem:[#allocation0]]
  $region53: #{tpu_custom_call.1} parent=0
    _
  %s6 = ssub.s32 1, %s4
  %s7 = scalar_select 0, %s6, %s4
  %8 = sst [smem:[#allocation2]] %s0
  $region1: #{tpu_custom_call.1} parent=0
    #allocation3 [shape = 'u8[8192]{0}', space=vmem, size = 0x2000, scoped, tag = 'input window, operand 1']
    #allocation4 [shape = 's32[2]{0}', space=sflag, size = 0x8, scoped, tag = 'scoped memory for tpu_custom_call.1']
    #allocation5 [shape = 's32[2]{0}', space=sflag, size = 0x8, scoped, tag = 'scoped memory for tpu_custom_call.1']
    #allocation6 [shape = 'u8[2048]{0}', space=vmem, size = 0x800, scoped, tag = 'input window, operand 2']
    #allocation7 [shape = 's32[2]{0}', space=sflag, size = 0x8, scoped, tag = 'scoped memory for tpu_custom_call.1']
    #allocation8 [shape = 'u8[8192]{0}', space=vmem, size = 0x2000, scoped, tag = 'output window, operand 0']
    %9 = vsyncpa [#allocation4], 0
    %s10 = scalar_lea.sflag [#allocation4], 1
    %11 = vsyncpa %s10, 0
    %12 = vsyncpa [#allocation7], 0
    %s13 = scalar_lea.sflag [#allocation7], 1
    %14 = vsyncpa %s13, 0
    %15 = vsyncpa [#allocation5], 0
    %s16 = scalar_lea.sflag [#allocation5], 1
    %17 = vsyncpa %s16, 0
    loop: start=0, step=1, limit=4
    $region2: #{tpu_custom_call.1} parent=1 // loop_pre_header
      _
    $region3: #{tpu_custom_call.1} parent=1 // loop_header
      %s19 = sphi 0, %s23
      %p20 = scmp.ge.s32.totalorder %s19, 4
      %s26 = sphi 0, %s38
      %s27 = sphi 0, %s34
      %s28 = sphi 0, %s26
      %s29 = sphi 0, %s27
      %s30 = sphi 0, %s28
      %s31 = sphi 0, %s29
      %s39 = sphi 0, %s39
      %s41 = sphi 0, %s39
      %s42 = sphi 0, %s41
      %s56 = sphi 0, %s42
      %s64 = sphi 0, %s66
      %s67 = sphi 0, %s64
      %s68 = sphi 0, %s67
      %s84 = sphi 0, %s68
      %s92 = sphi 0, %s94
      %s95 = sphi 0, %s92
      %s96 = sphi 0, %s95
      %s112 = sphi 0, %s96
      %s120 = sphi 0, %s122
      %s123 = sphi 0, %s120
      %s124 = sphi 0, %s123
      %s140 = sphi 0, %s124
    $region4: #{tpu_custom_call.1} parent=1 // loop_header_branch
      %22 = sbr.rel (%p20) target = $region8
    $region5: #{tpu_custom_call.1} parent=1 // loop_body
      %s24 = ssub.s32 %s19, 1
      %s25 = ssub.s32 %s19, 2
      %s32 = sadd.s32 1, %s27
      %p33 = scmp.ge.s32.totalorder %s32, 2
      %s34 = scalar_select %p33, 0, %s32
      %s35 = sadd.s32 1, %s26
      %s36 = scalar_select %p33, %s35, %s26
      %p37 = scmp.ge.s32.totalorder %s36, 1
      %s38 = scalar_select %p37, 0, %s36
      %s40 = sadd.s32 %s39, 1
      %p43 = scmp.eq.s32.totalorder %s19, 1
      %p44 = scmp.ne.s32.totalorder %s39, %s41
      %p45 = scmp.eq.s32.totalorder %s19, 0
      %p46 = por %p44, %p45
      %p47 = scmp.ne.s32.totalorder %s39, %s41
      %p48 = scmp.eq.s32.totalorder %s24, 1
      %p49 = por %p47, %p48
      %p50 = scmp.ne.s32.totalorder %s41, %s42
      %p51 = scmp.eq.s32.totalorder %s24, 0
      %p52 = por %p50, %p51
      %p53 = scmp.ne.s32.totalorder %s41, %s42
      %p54 = scmp.eq.s32.totalorder %s25, 1
      %p55 = por %p53, %p54
      %p57 = scmp.ne.s32.totalorder %s42, %s56
      %p58 = scmp.eq.s32.totalorder %s25, 0
      %p59 = por %p57, %p58
      %s60 = ssub.s32 %s26, %s38
      %s61 = ssub.s32 %s27, %s34
      %s62 = sor.u32 %s60, %s61
      %p63 = scmp.eq.s32.totalorder %s62, 0
      %s65 = sadd.s32 %s64, 1
      %s66 = scalar_select %p63, %s64, %s65
      %p69 = pneg %p63
      %p70 = scmp.eq.s32.totalorder %s19, 1
      %p71 = por %p69, %p70
      %p72 = scmp.ne.s32.totalorder %s64, %s67
      %p73 = scmp.eq.s32.totalorder %s19, 0
      %p74 = por %p72, %p73
      %p75 = scmp.ne.s32.totalorder %s64, %s67
      %p76 = scmp.eq.s32.totalorder %s24, 1
      %p77 = por %p75, %p76
      %p78 = scmp.ne.s32.totalorder %s67, %s68
      %p79 = scmp.eq.s32.totalorder %s24, 0
      %p80 = por %p78, %p79
      %p81 = scmp.ne.s32.totalorder %s67, %s68
      %p82 = scmp.eq.s32.totalorder %s25, 1
      %p83 = por %p81, %p82
      %p85 = scmp.ne.s32.totalorder %s68, %s84
      %p86 = scmp.eq.s32.totalorder %s25, 0
      %p87 = por %p85, %p86
      %s88 = ssub.s32 %s26, %s38
      %s89 = ssub.s32 %s27, %s34
      %s90 = sor.u32 %s88, %s89
      %p91 = scmp.eq.s32.totalorder %s90, 0
      %s93 = sadd.s32 %s92, 1
      %s94 = scalar_select %p91, %s92, %s93
      %p97 = pneg %p91
      %p98 = scmp.eq.s32.totalorder %s19, 1
      %p99 = por %p97, %p98
      %p100 = scmp.ne.s32.totalorder %s92, %s95
      %p101 = scmp.eq.s32.totalorder %s19, 0
      %p102 = por %p100, %p101
      %p103 = scmp.ne.s32.totalorder %s92, %s95
      %p104 = scmp.eq.s32.totalorder %s24, 1
      %p105 = por %p103, %p104
      %p106 = scmp.ne.s32.totalorder %s95, %s96
      %p107 = scmp.eq.s32.totalorder %s24, 0
      %p108 = por %p106, %p107
      %p109 = scmp.ne.s32.totalorder %s95, %s96
      %p110 = scmp.eq.s32.totalorder %s25, 1
      %p111 = por %p109, %p110
      %p113 = scmp.ne.s32.totalorder %s96, %s112
      %p114 = scmp.eq.s32.totalorder %s25, 0
      %p115 = por %p113, %p114
      %s116 = ssub.s32 %s26, %s38
      %s117 = ssub.s32 %s27, %s34
      %s118 = sor.u32 %s116, %s117
      %p119 = scmp.eq.s32.totalorder %s118, 0
      %s121 = sadd.s32 %s120, 1
      %s122 = scalar_select %p119, %s120, %s121
      %p125 = pneg %p119
      %p126 = scmp.eq.s32.totalorder %s19, 1
      %p127 = por %p125, %p126
      %p128 = scmp.ne.s32.totalorder %s120, %s123
      %p129 = scmp.eq.s32.totalorder %s19, 0
      %p130 = por %p128, %p129
      %p131 = scmp.ne.s32.totalorder %s120, %s123
      %p132 = scmp.eq.s32.totalorder %s24, 1
      %p133 = por %p131, %p132
      %p134 = scmp.ne.s32.totalorder %s123, %s124
      %p135 = scmp.eq.s32.totalorder %s24, 0
      %p136 = por %p134, %p135
      %p137 = scmp.ne.s32.totalorder %s123, %s124
      %p138 = scmp.eq.s32.totalorder %s25, 1
      %p139 = por %p137, %p138
      %p141 = scmp.ne.s32.totalorder %s124, %s140
      %p142 = scmp.eq.s32.totalorder %s25, 0
      %p143 = por %p141, %p142
      %p144 = scmp.le.s32.totalorder 1, %s19
      %p145 = scmp.lt.s32.totalorder %s19, 3
      %p146 = pnand %p144, %p145
      %p147 = pneg %p146
      // Predicated region
      $region9: #{tpu_custom_call.1} parent=5 // pred_check
        _
      $region10: #{tpu_custom_call.1} parent=5 // pred_check_branch
        %149 = sbr.rel (%p146) target = $region12
      $region11: #{tpu_custom_call.1} parent=5 // pred_region
        %s150 = ssub.s32 %s19, 1
        // Predicated region
        $region13: #{tpu_custom_call.1} parent=11 // pred_check
          %p151 = pneg %p52
        $region14: #{tpu_custom_call.1} parent=11 // pred_check_branch
          %153 = sbr.rel (%p151) target = $region16
        $region15: #{tpu_custom_call.1} parent=11 // pred_region
          _
        $region16: #{tpu_custom_call.1} parent=11 // pred_fallthru
          _
      $region12: #{tpu_custom_call.1} parent=5 // pred_fallthru
        _
      %p154 = scmp.lt.s32.totalorder %s19, 2
      // Predicated region
      $region17: #{tpu_custom_call.1} parent=5 // pred_check
        %p155 = pneg %p154
      $region18: #{tpu_custom_call.1} parent=5 // pred_check_branch
        %157 = sbr.rel (%p155) target = $region20
      $region19: #{tpu_custom_call.1} parent=5 // pred_region
        // Predicated region
        $region21: #{tpu_custom_call.1} parent=19 // pred_check
          %p158 = pneg %p74
        $region22: #{tpu_custom_call.1} parent=19 // pred_check_branch
          %160 = sbr.rel (%p158) target = $region24
        $region23: #{tpu_custom_call.1} parent=19 // pred_region
          %s161 = sand.u32 %s64, 1
          %s162 = scalar_lea.sflag [#allocation4], %s161
          %s163 = sand.u32 %s64, 1
          %s164 = smul.addr %s163, 8
          %s165 = scalar_lea.vmem [#allocation3], %s164
          %s167 = ssub.s32 128, 128
          %168 = vsyncadd %s162, %s167
          %s169 = smul.addr %s26, 2
          %s170 = sadd.s32 %s27, %s169
          %s171 = smul.addr %s170, 128
          %s172 = scalar_lea.hbm %s1, %s171
          %s174 = sshll.u32 %s165, 4
          %s175 = int_to_ptr.vmem [resolvable:$true] %s174
          %177 = dma.hbm_to_vmem [thread:$0]  %s172, 128, %s175, %s162
        $region24: #{tpu_custom_call.1} parent=19 // pred_fallthru
          _
        // Predicated region
        $region25: #{tpu_custom_call.1} parent=19 // pred_check
          %p178 = pneg %p102
        $region26: #{tpu_custom_call.1} parent=19 // pred_check_branch
          %180 = sbr.rel (%p178) target = $region28
        $region27: #{tpu_custom_call.1} parent=19 // pred_region
          %s181 = sand.u32 %s92, 1
          %s182 = scalar_lea.sflag [#allocation7], %s181
          %s183 = sand.u32 %s92, 1
          %s184 = smul.addr %s183, 2
          %s185 = scalar_lea.vmem [#allocation6], %s184
          %s187 = ssub.s32 32, 32
          %188 = vsyncadd %s182, %s187
          %s189 = smul.addr %s26, 2
          %s190 = sadd.s32 %s27, %s189
          %s191 = smul.addr %s190, 32
          %s192 = scalar_lea.hbm %s2, %s191
          %s194 = sshll.u32 %s185, 4
          %s195 = int_to_ptr.vmem [resolvable:$true] %s194
          %197 = dma.hbm_to_vmem [thread:$0]  %s192, 32, %s195, %s182
        $region28: #{tpu_custom_call.1} parent=19 // pred_fallthru
          _
      $region20: #{tpu_custom_call.1} parent=5 // pred_fallthru
        _
      %p198 = scmp.le.s32.totalorder 1, %s19
      %p199 = scmp.lt.s32.totalorder %s19, 3
      %p200 = pnand %p198, %p199
      %p201 = pneg %p200
      // Predicated region
      $region29: #{tpu_custom_call.1} parent=5 // pred_check
        _
      $region30: #{tpu_custom_call.1} parent=5 // pred_check_branch
        %203 = sbr.rel (%p200) target = $region32
      $region31: #{tpu_custom_call.1} parent=5 // pred_region
        %s204 = ssub.s32 %s19, 1
        %s205 = sand.u32 %s67, 1
        %s206 = scalar_lea.sflag [#allocation4], %s205
        %s207 = sand.u32 %s67, 1
        %s208 = smul.addr %s207, 8
        %s209 = scalar_lea.vmem [#allocation3], %s208
        // Predicated region
        $region33: #{tpu_custom_call.1} parent=31 // pred_check
          %p210 = pneg %p80
        $region34: #{tpu_custom_call.1} parent=31 // pred_check_branch
          %212 = sbr.rel (%p210) target = $region36
        $region35: #{tpu_custom_call.1} parent=31 // pred_region
          %213 = dma.done %s206, 128
        $region36: #{tpu_custom_call.1} parent=31 // pred_fallthru
          _
        %s214 = sand.u32 %s95, 1
        %s215 = scalar_lea.sflag [#allocation7], %s214
        %s216 = sand.u32 %s95, 1
        %s217 = smul.addr %s216, 2
        %s218 = scalar_lea.vmem [#allocation6], %s217
        // Predicated region
        $region37: #{tpu_custom_call.1} parent=31 // pred_check
          %p219 = pneg %p108
        $region38: #{tpu_custom_call.1} parent=31 // pred_check_branch
          %221 = sbr.rel (%p219) target = $region40
        $region39: #{tpu_custom_call.1} parent=31 // pred_region
          %222 = dma.done %s215, 32
        $region40: #{tpu_custom_call.1} parent=31 // pred_fallthru
          _
        %p223 = pneg %p52
        %p224 = pneg %p49
        %s225 = sand.u32 %s67, 1
        %s226 = scalar_lea.sflag [#allocation4], %s225
        %s227 = sand.u32 %s67, 1
        %s228 = smul.addr %s227, 8
        %s229 = scalar_lea.vmem [#allocation3], %s228
        %p230 = pneg %p80
        %p231 = pneg %p77
        %s232 = sand.u32 %s95, 1
        %s233 = scalar_lea.sflag [#allocation7], %s232
        %s234 = sand.u32 %s95, 1
        %s235 = smul.addr %s234, 2
        %s236 = scalar_lea.vmem [#allocation6], %s235
        %p237 = pneg %p108
        %p238 = pneg %p105
        %p239 = pneg %p136
        %p240 = pneg %p133
        %s241 = sand.u32 %s123, 1
        %s242 = scalar_lea.sflag [#allocation5], %s241
        %s243 = sand.u32 %s123, 1
        %s244 = smul.addr %s243, 8
        %s245 = scalar_lea.vmem [#allocation8], %s244
        %s248 = sld [smem:[#allocation2]]
        %v249 = vld [vmem:[%s209] sm:$0xff]
        %v250 = vstv %s248
        %v251 = vmul.f32 %v249, %v250
        %v252 = vld [vmem:[%s218] sm:$0x3]
        %vm253 = vnez %v252
        %v254 = vsel %vm253, 16843009, 0
        %v255 = vunpack.c.0.s8 %v254
        %vm256 = vcmp.ne.s32.totalorder %v255, 0
        %v257 = vsel %vm256, 0.0, %v251
        %258 = vst [vmem:[%s245] sm:$0xff] %v257
        %s259 = sand.u32 %s123, 1
        %s260 = scalar_lea.sflag [#allocation5], %s259
        %s261 = sand.u32 %s123, 1
        %s262 = smul.addr %s261, 8
        %s263 = scalar_lea.vmem [#allocation8], %s262
        // Predicated region
        $region41: #{tpu_custom_call.1} parent=31 // pred_check
          %p264 = pneg %p133
        $region42: #{tpu_custom_call.1} parent=31 // pred_check_branch
          %266 = sbr.rel (%p264) target = $region44
        $region43: #{tpu_custom_call.1} parent=31 // pred_region
          %s268 = ssub.s32 128, 128
          %269 = vsyncadd %s260, %s268
          %s270 = smul.addr %s28, 2
          %s271 = sadd.s32 %s29, %s270
          %s272 = smul.addr %s271, 128
          %s273 = scalar_lea.hbm %s3, %s272
          %s275 = sshll.u32 %s263, 4
          %s276 = int_to_ptr.vmem [resolvable:$true] %s275
          %278 = dma.vmem_to_hbm [thread:$0]  %s276, 128, %s273, %s260
        $region44: #{tpu_custom_call.1} parent=31 // pred_fallthru
          _
      $region32: #{tpu_custom_call.1} parent=5 // pred_fallthru
        _
      %p279 = scmp.le.s32.totalorder 2, %s19
      // Predicated region
      $region45: #{tpu_custom_call.1} parent=5 // pred_check
        %p280 = pneg %p279
      $region46: #{tpu_custom_call.1} parent=5 // pred_check_branch
        %282 = sbr.rel (%p280) target = $region48
      $region47: #{tpu_custom_call.1} parent=5 // pred_region
        %s283 = ssub.s32 %s19, 2
        // Predicated region
        $region49: #{tpu_custom_call.1} parent=47 // pred_check
          %p284 = pneg %p139
        $region50: #{tpu_custom_call.1} parent=47 // pred_check_branch
          %286 = sbr.rel (%p284) target = $region52
        $region51: #{tpu_custom_call.1} parent=47 // pred_region
          %s287 = sand.u32 %s124, 1
          %s288 = scalar_lea.sflag [#allocation5], %s287
          %s289 = sand.u32 %s124, 1
          %s290 = smul.addr %s289, 8
          %s291 = scalar_lea.vmem [#allocation8], %s290
          %292 = dma.done %s288, 128
        $region52: #{tpu_custom_call.1} parent=47 // pred_fallthru
          _
      $region48: #{tpu_custom_call.1} parent=5 // pred_fallthru
        _
    $region6: #{tpu_custom_call.1} parent=1 // loop_footer
      %s23 = sadd.s32 1, %s19
    $region7: #{tpu_custom_call.1} parent=1 // loop_footer_branch
      %18 = sbr.rel target = $region3
    $region8: #{tpu_custom_call.1} parent=1 // loop_exit
      _
    %293 = vsyncpa [#allocation4], 1
    %s294 = scalar_lea.sflag [#allocation4], 1
    %295 = vsyncpa %s294, 1
    %296 = vsyncpa [#allocation7], 1
    %s297 = scalar_lea.sflag [#allocation7], 1
    %298 = vsyncpa %s297, 1
    %299 = vsyncpa [#allocation5], 1
    %s300 = scalar_lea.sflag [#allocation5], 1
    %301 = vsyncpa %s300, 1

</llo_original>
